<compile_context>
chip_gen: v7x
topology: tpu7x:2x2x1
jax: 0.10.0
libtpu: 0.0.40
codegen_flags: <defaults>
</compile_context>

<pallas_src>
import functools

import jax
import jax.numpy as jnp
from jax.experimental import pallas as pl
from jax.experimental.pallas import tpu as pltpu


def _ce_row_loss_kernel(x_ref, tgt_ref, loss_ref, *, on_val, off_val):
    """Per-row label-smoothed cross-entropy for one (TB, C) batch tile.

    x_ref:    VMEM ref, (TB, C) logits (any float dtype; upcast to f32 here).
    tgt_ref:  VMEM ref, (TB, 1) int32 target class index per row.
    loss_ref: VMEM ref, (TB, 1) f32 per-row loss output.
    """
    x = x_ref[...].astype(jnp.float32)            # (TB, C)
    tgt = tgt_ref[...]                            # (TB, 1) int32
    tb, c = x.shape

    # Numerically stable log-softmax pieces (no (TB, C) logp materialized).
    m = jnp.max(x, axis=1, keepdims=True)                         # (TB, 1)
    shifted = x - m                                               # (TB, C)
    lse = jnp.log(jnp.sum(jnp.exp(shifted), axis=1, keepdims=True))  # (TB, 1)

    # sum_j logp_j  = sum_j shifted_j - C * lse
    sum_shifted = jnp.sum(shifted, axis=1, keepdims=True)         # (TB, 1)
    sum_logp = sum_shifted - jnp.float32(c) * lse                 # (TB, 1)

    # logp at the target column, picked with a compare+select+reduce
    # (reuses `shifted`; no scatter / no true_dist array).
    col_ids = jax.lax.broadcasted_iota(jnp.int32, (tb, c), 1)     # (TB, C)
    tgt_shifted = jnp.sum(jnp.where(col_ids == tgt, shifted, 0.0),
                          axis=1, keepdims=True)                  # (TB, 1)
    logp_tgt = tgt_shifted - lse                                  # (TB, 1)

    # loss_row = -sum_j true_dist_j * logp_j
    #          = -( off * sum_j logp_j + (on - off) * logp_tgt )
    off = jnp.float32(off_val)
    delta = jnp.float32(on_val - off_val)
    loss_ref[...] = -(off * sum_logp + delta * logp_tgt)


def _choose_block_rows(batch, num_classes, itemsize,
                       target_tile_bytes=4 * 1024 * 1024, max_rows=2048):
    """Pick a batch tile so one logits tile is a few MiB and sublane-aligned."""
    align = max(8, 32 // max(1, itemsize))       # 8 rows for f32, 16 for bf16, ...
    rows = target_tile_bytes // max(1, num_classes * itemsize)
    rows = max(align, (rows // align) * align)
    rows = min(rows, max_rows)
    padded_b = ((batch + align - 1) // align) * align
    return max(align, min(rows, padded_b))


def cross_entropy_loss(inputs, targets, *, num_classes, epsilon=0.1,
                       label_smooth=True, block_rows=None):
    """Pallas-backed equivalent of the PyTorch CrossEntropyLoss.forward.

    inputs:  [B, num_classes] float logits (f32 or bf16 — do NOT upcast before call).
    targets: [B] integer class indices.
    Returns a float32 scalar (mean loss over the batch).
    """
    assert inputs.ndim == 2 and inputs.shape[1] == num_classes, \
        "Inputs must be [batch_size, num_classes]"
    eps = float(epsilon) if label_smooth else 0.0
    # Guard num_classes == 1 (eps/(C-1) would divide by zero; smoothing is moot).
    off_val = eps / (num_classes - 1) if num_classes > 1 else 0.0
    on_val = 1.0 - eps

    B, C = inputs.shape
    tgt2d = targets.astype(jnp.int32).reshape(B, 1)

    itemsize = jnp.dtype(inputs.dtype).itemsize
    if block_rows is None:
        tb = _choose_block_rows(B, C, itemsize)
    else:
        align = max(8, 32 // max(1, itemsize))
        tb = ((int(block_rows) + align - 1) // align) * align

    grid = (pl.cdiv(B, tb),)
    kernel = functools.partial(_ce_row_loss_kernel,
                               on_val=on_val, off_val=off_val)

    per_row = pl.pallas_call(
        kernel,
        out_shape=jax.ShapeDtypeStruct((B, 1), jnp.float32),
        grid=grid,
        in_specs=[
            pl.BlockSpec((tb, C), lambda i: (i, 0)),   # logits tile (storage dtype)
            pl.BlockSpec((tb, 1), lambda i: (i, 0)),   # targets tile
        ],
        out_specs=pl.BlockSpec((tb, 1), lambda i: (i, 0)),
        compiler_params=pltpu.CompilerParams(
            dimension_semantics=("parallel",),          # independent batch tiles
            vmem_limit_bytes=32 * 1024 * 1024,          # explicit (v5e default = 16 MiB)
        ),
    )(inputs, tgt2d)

    # Tiny reduce in the wrapper; keeps the batch grid axis fully parallel.
    return jnp.mean(per_row)


def _reference_loss(inputs, targets, *, num_classes, epsilon=0.1,
                    label_smooth=True):
    """Pure-JAX reference matching the PyTorch module (scatter smoothing)."""
    eps = float(epsilon) if label_smooth else 0.0
    off = eps / (num_classes - 1) if num_classes > 1 else 0.0
    logp = jax.nn.log_softmax(inputs.astype(jnp.float32), axis=1)
    B, C = inputs.shape
    true_dist = jnp.full((B, C), off, dtype=jnp.float32)
    true_dist = true_dist.at[jnp.arange(B), targets].set(1.0 - eps)
    return jnp.mean(-jnp.sum(true_dist * logp, axis=1))


if __name__ == "__main__":
    key = jax.random.PRNGKey(0)

    # Case 1: f32 logits, batch divisible by the tile (grid of 3).
    num_classes, batch = 40, 48
    k_x, k_t, key = (*jax.random.split(key, 2), key)
    x = jax.random.normal(k_x, (batch, num_classes), dtype=jnp.float32)
    t = jax.random.randint(k_t, (batch,), 0, num_classes, dtype=jnp.int32)
    loss = jax.block_until_ready(cross_entropy_loss(
        x, t, num_classes=num_classes, epsilon=0.1, label_smooth=True,
        block_rows=16))
    ref = jax.block_until_ready(_reference_loss(
        x, t, num_classes=num_classes, epsilon=0.1, label_smooth=True))
    assert jnp.allclose(loss, ref, atol=1e-5, rtol=1e-5), (loss, ref)

    # Case 2: batch NOT divisible by the tile (partial last block).
    num_classes, batch = 37, 20
    k_x, k_t, key = (*jax.random.split(key, 2), key)
    x = jax.random.normal(k_x, (batch, num_classes), dtype=jnp.float32)
    t = jax.random.randint(k_t, (batch,), 0, num_classes, dtype=jnp.int32)
    loss = jax.block_until_ready(cross_entropy_loss(
        x, t, num_classes=num_classes, epsilon=0.1, label_smooth=True,
        block_rows=16))
    ref = jax.block_until_ready(_reference_loss(
        x, t, num_classes=num_classes, epsilon=0.1, label_smooth=True))
    assert jnp.allclose(loss, ref, atol=1e-5, rtol=1e-5), (loss, ref)

    # Case 3: bf16 logits stay bf16 across the DMA (upcast happens in-kernel);
    # also exercises label_smooth=False (epsilon -> 0).
    num_classes, batch = 32, 64
    k_x, k_t, key = (*jax.random.split(key, 2), key)
    xb = jax.random.normal(k_x, (batch, num_classes), dtype=jnp.float32
                           ).astype(jnp.bfloat16)
    t = jax.random.randint(k_t, (batch,), 0, num_classes, dtype=jnp.int32)
    loss = jax.block_until_ready(cross_entropy_loss(
        xb, t, num_classes=num_classes, epsilon=0.1, label_smooth=False))
    ref = jax.block_until_ready(_reference_loss(
        xb, t, num_classes=num_classes, epsilon=0.1, label_smooth=False))
    assert jnp.allclose(loss, ref, atol=1e-4, rtol=1e-4), (loss, ref)

    print("KERNEL_OK")
</pallas_src>

<mosaic_0001>
module attributes {stable_mosaic.version = 11 : i64} {
  func.func @_ce_row_loss_kernel(%arg0: i32, %arg1: memref<16x40xf32, #tpu.memory_space<vmem>>, %arg2: memref<16x1xi32, #tpu.memory_space<vmem>>, %arg3: memref<16x1xf32, #tpu.memory_space<vmem>>) attributes {dimension_semantics = [#tpu.dimension_semantics<parallel>], iteration_bounds = array<i64: 3>, scalar_prefetch = 0 : i64, scratch_operands = 0 : i64, tpu.core_type = #tpu.core_type<tc>, window_params = [{transform_indices = @transform_0, window_bounds = array<i64: 16, 40>}, {transform_indices = @transform_1, window_bounds = array<i64: 16, 1>}, {transform_indices = @transform_2, window_bounds = array<i64: 16, 1>}]} {
    %c0 = arith.constant 0 : index
    %c0_0 = arith.constant 0 : index
    %0 = vector.load %arg1[%c0, %c0_0] : memref<16x40xf32, #tpu.memory_space<vmem>>, vector<16x40xf32>
    %c0_1 = arith.constant 0 : index
    %c0_2 = arith.constant 0 : index
    %1 = vector.load %arg2[%c0_1, %c0_2] : memref<16x1xi32, #tpu.memory_space<vmem>>, vector<16x1xi32>
    %cst = arith.constant dense<0xFF800000> : vector<16xf32>
    %2 = vector.multi_reduction <maximumf>, %0, %cst [1] : vector<16x40xf32> to vector<16xf32>
    %3 = vector.shape_cast %2 : vector<16xf32> to vector<16x1xf32>
    %4 = vector.broadcast %3 : vector<16x1xf32> to vector<16x40xf32>
    %5 = arith.subf %0, %4 : vector<16x40xf32>
    %6 = math.exp %5 : vector<16x40xf32>
    %cst_3 = arith.constant dense<0.000000e+00> : vector<16xf32>
    %7 = vector.multi_reduction <add>, %6, %cst_3 [1] : vector<16x40xf32> to vector<16xf32>
    %8 = vector.shape_cast %7 : vector<16xf32> to vector<16x1xf32>
    %9 = math.log %8 : vector<16x1xf32>
    %cst_4 = arith.constant dense<0.000000e+00> : vector<16xf32>
    %10 = vector.multi_reduction <add>, %5, %cst_4 [1] : vector<16x40xf32> to vector<16xf32>
    %11 = vector.shape_cast %10 : vector<16xf32> to vector<16x1xf32>
    %cst_5 = arith.constant 4.000000e+01 : f32
    %12 = vector.broadcast %cst_5 : f32 to vector<16x1xf32>
    %13 = arith.mulf %12, %9 : vector<16x1xf32>
    %14 = arith.subf %11, %13 : vector<16x1xf32>
    %15 = tpu.iota {dimensions = array<i32: 1>} : vector<16x40xi32>
    %16 = vector.broadcast %1 : vector<16x1xi32> to vector<16x40xi32>
    %17 = arith.cmpi eq, %15, %16 : vector<16x40xi32>
    %cst_6 = arith.constant 0.000000e+00 : f32
    %18 = vector.broadcast %cst_6 : f32 to vector<16x40xf32>
    %19 = arith.select %17, %5, %18 : vector<16x40xi1>, vector<16x40xf32>
    %cst_7 = arith.constant dense<0.000000e+00> : vector<16xf32>
    %20 = vector.multi_reduction <add>, %19, %cst_7 [1] : vector<16x40xf32> to vector<16xf32>
    %21 = vector.shape_cast %20 : vector<16xf32> to vector<16x1xf32>
    %22 = arith.subf %21, %9 : vector<16x1xf32>
    %cst_8 = arith.constant 0.00256410264 : f32
    %23 = vector.broadcast %cst_8 : f32 to vector<16x1xf32>
    %24 = arith.mulf %23, %14 : vector<16x1xf32>
    %cst_9 = arith.constant 0.897435904 : f32
    %25 = vector.broadcast %cst_9 : f32 to vector<16x1xf32>
    %26 = arith.mulf %25, %22 : vector<16x1xf32>
    %27 = arith.addf %24, %26 : vector<16x1xf32>
    %cst_10 = arith.constant 0.000000e+00 : f32
    %28 = vector.broadcast %cst_10 : f32 to vector<16x1xf32>
    %29 = arith.subf %28, %27 : vector<16x1xf32>
    %c0_11 = arith.constant 0 : index
    %c0_12 = arith.constant 0 : index
    %30 = vector.load %arg3[%c0_11, %c0_12] : memref<16x1xf32, #tpu.memory_space<vmem>>, vector<16x1xf32>
    tpu.vector_store %arg3[%c0_11, %c0_12], %29 {strides = array<i32>} : memref<16x1xf32, #tpu.memory_space<vmem>>, vector<16x1xf32>,
    return
  }
  func.func @transform_0(%arg0: i32) -> (i32, i32) {
    %c0_i32 = arith.constant 0 : i32
    %c0_i32_0 = arith.constant 0 : i32
    return %arg0, %c0_i32 : i32, i32
  }
  func.func @transform_1(%arg0: i32) -> (i32, i32) {
    %c0_i32 = arith.constant 0 : i32
    %c0_i32_0 = arith.constant 0 : i32
    return %arg0, %c0_i32 : i32, i32
  }
  func.func @transform_2(%arg0: i32) -> (i32, i32) {
    %c0_i32 = arith.constant 0 : i32
    %c0_i32_0 = arith.constant 0 : i32
    return %arg0, %c0_i32 : i32, i32
  }
}

</mosaic_0001>

<llo_original>
// kernel: tpu_custom_call.1
$region0: #{tpu_custom_call.1}
  #allocation0 [shape = 'u32[]', space=smem, size = 0x4, offset = 0x4, fixed_abs, tag = 'smem constant byte address 0x4 - core index']
  #allocation1 [shape = 'u32[144,128]{1,0:T(1,128)}', space=vmem, size = 0x12000, scoped, tag = 'internal scratch']
  %s0 = inlined_call_operand.vmem [shape: f32[48,40], index: 0, kind: input, shape index: {}]
  %s1 = inlined_call_operand.vmem [shape: s32[48,1], index: 1, kind: input, shape index: {}]
  %s2 = inlined_call_operand.vmem [shape: f32[48,1], index: 2, kind: output, shape index: {}]
  %s3 = sld [smem:[#allocation0]]
  $region41: #{tpu_custom_call.1} parent=0
    _
  %s5 = ssub.s32 1, %s3
  %s6 = scalar_select 0, %s5, %s3
  loop: start=0, step=1, limit=5
  $region2: #{tpu_custom_call.1} parent=0 // loop_pre_header
    _
  $region3: #{tpu_custom_call.1} parent=0 // loop_header
    %s8 = sphi 0, %s12
    %p9 = scmp.ge.s32.totalorder %s8, 5
    %s18 = sphi 0, %s20
    %s21 = sphi 0, %s18
    %s22 = sphi 0, %s21
    %s38 = sphi 0, %s22
    %s44 = sphi 0, %s46
    %s47 = sphi 0, %s44
    %s48 = sphi 0, %s47
    %s64 = sphi 0, %s48
    %s70 = sphi 0, %s72
    %s73 = sphi 0, %s70
    %s74 = sphi 0, %s73
    %s90 = sphi 0, %s74
  $region4: #{tpu_custom_call.1} parent=0 // loop_header_branch
    %11 = sbr.rel (%p9) target = $region8
  $region5: #{tpu_custom_call.1} parent=0 // loop_body
    %s13 = ssub.s32 %s8, 1
    %s14 = ssub.s32 %s8, 2
    %s15 = sadd.s32 %s8, 1
    %s16 = ssub.s32 %s8, %s15
    %p17 = scmp.eq.s32.totalorder %s16, 0
    %s19 = sadd.s32 %s18, 1
    %s20 = scalar_select %p17, %s18, %s19
    %p23 = pneg %p17
    %p24 = scmp.eq.s32.totalorder %s8, 2
    %p25 = por %p23, %p24
    %p26 = scmp.ne.s32.totalorder %s18, %s21
    %p27 = scmp.eq.s32.totalorder %s8, 0
    %p28 = por %p26, %p27
    %p29 = scmp.ne.s32.totalorder %s18, %s21
    %p30 = scmp.eq.s32.totalorder %s13, 2
    %p31 = por %p29, %p30
    %p32 = scmp.ne.s32.totalorder %s21, %s22
    %p33 = scmp.eq.s32.totalorder %s13, 0
    %p34 = por %p32, %p33
    %p35 = scmp.ne.s32.totalorder %s21, %s22
    %p36 = scmp.eq.s32.totalorder %s14, 2
    %p37 = por %p35, %p36
    %p39 = scmp.ne.s32.totalorder %s22, %s38
    %p40 = scmp.eq.s32.totalorder %s14, 0
    %p41 = por %p39, %p40
    %s42 = ssub.s32 %s8, %s15
    %p43 = scmp.eq.s32.totalorder %s42, 0
    %s45 = sadd.s32 %s44, 1
    %s46 = scalar_select %p43, %s44, %s45
    %p49 = pneg %p43
    %p50 = scmp.eq.s32.totalorder %s8, 2
    %p51 = por %p49, %p50
    %p52 = scmp.ne.s32.totalorder %s44, %s47
    %p53 = scmp.eq.s32.totalorder %s8, 0
    %p54 = por %p52, %p53
    %p55 = scmp.ne.s32.totalorder %s44, %s47
    %p56 = scmp.eq.s32.totalorder %s13, 2
    %p57 = por %p55, %p56
    %p58 = scmp.ne.s32.totalorder %s47, %s48
    %p59 = scmp.eq.s32.totalorder %s13, 0
    %p60 = por %p58, %p59
    %p61 = scmp.ne.s32.totalorder %s47, %s48
    %p62 = scmp.eq.s32.totalorder %s14, 2
    %p63 = por %p61, %p62
    %p65 = scmp.ne.s32.totalorder %s48, %s64
    %p66 = scmp.eq.s32.totalorder %s14, 0
    %p67 = por %p65, %p66
    %s68 = ssub.s32 %s8, %s15
    %p69 = scmp.eq.s32.totalorder %s68, 0
    %s71 = sadd.s32 %s70, 1
    %s72 = scalar_select %p69, %s70, %s71
    %p75 = pneg %p69
    %p76 = scmp.eq.s32.totalorder %s8, 2
    %p77 = por %p75, %p76
    %p78 = scmp.ne.s32.totalorder %s70, %s73
    %p79 = scmp.eq.s32.totalorder %s8, 0
    %p80 = por %p78, %p79
    %p81 = scmp.ne.s32.totalorder %s70, %s73
    %p82 = scmp.eq.s32.totalorder %s13, 2
    %p83 = por %p81, %p82
    %p84 = scmp.ne.s32.totalorder %s73, %s74
    %p85 = scmp.eq.s32.totalorder %s13, 0
    %p86 = por %p84, %p85
    %p87 = scmp.ne.s32.totalorder %s73, %s74
    %p88 = scmp.eq.s32.totalorder %s14, 2
    %p89 = por %p87, %p88
    %p91 = scmp.ne.s32.totalorder %s74, %s90
    %p92 = scmp.eq.s32.totalorder %s14, 0
    %p93 = por %p91, %p92
    %p94 = scmp.le.s32.totalorder 1, %s8
    %p95 = scmp.lt.s32.totalorder %s8, 4
    %p96 = pnand %p94, %p95
    %p97 = pneg %p96
    // Predicated region
    $region9: #{tpu_custom_call.1} parent=5 // pred_check
      _
    $region10: #{tpu_custom_call.1} parent=5 // pred_check_branch
      %99 = sbr.rel (%p96) target = $region12
    $region11: #{tpu_custom_call.1} parent=5 // pred_region
      %s100 = ssub.s32 %s8, 1
    $region12: #{tpu_custom_call.1} parent=5 // pred_fallthru
      _
    %p101 = scmp.lt.s32.totalorder %s8, 3
    // Predicated region
    $region13: #{tpu_custom_call.1} parent=5 // pred_check
      %p102 = pneg %p101
    $region14: #{tpu_custom_call.1} parent=5 // pred_check_branch
      %104 = sbr.rel (%p102) target = $region16
    $region15: #{tpu_custom_call.1} parent=5 // pred_region
      // Predicated region
      $region17: #{tpu_custom_call.1} parent=15 // pred_check
        %p105 = pneg %p28
      $region18: #{tpu_custom_call.1} parent=15 // pred_check_branch
        %107 = sbr.rel (%p105) target = $region20
      $region19: #{tpu_custom_call.1} parent=15 // pred_region
        %s108 = smul.u32 2, %s8
        %p109 = scmp.lt.s32.totalorder %s108, 5
        %s110 = scalar_select %p109, %s108, 5
        %s111 = smul.addr %s110, 8
        %s112 = scalar_lea.vmem %s0, %s111
        %s113 = smul.u32 2, %s8
      $region20: #{tpu_custom_call.1} parent=15 // pred_fallthru
        _
      // Predicated region
      $region21: #{tpu_custom_call.1} parent=15 // pred_check
        %p114 = pneg %p54
      $region22: #{tpu_custom_call.1} parent=15 // pred_check_branch
        %116 = sbr.rel (%p114) target = $region24
      $region23: #{tpu_custom_call.1} parent=15 // pred_region
        %s117 = smul.u32 2, %s8
        %p118 = scmp.lt.s32.totalorder %s117, 5
        %s119 = scalar_select %p118, %s117, 5
        %s120 = smul.addr %s119, 8
        %s121 = scalar_lea.vmem %s1, %s120
        %s122 = smul.u32 2, %s8
      $region24: #{tpu_custom_call.1} parent=15 // pred_fallthru
        _
    $region16: #{tpu_custom_call.1} parent=5 // pred_fallthru
      _
    %p123 = scmp.le.s32.totalorder 1, %s8
    %p124 = scmp.lt.s32.totalorder %s8, 4
    %p125 = pnand %p123, %p124
    %p126 = pneg %p125
    // Predicated region
    $region25: #{tpu_custom_call.1} parent=5 // pred_check
      _
    $region26: #{tpu_custom_call.1} parent=5 // pred_check_branch
      %128 = sbr.rel (%p125) target = $region28
    $region27: #{tpu_custom_call.1} parent=5 // pred_region
      %s129 = ssub.s32 %s8, 1
      %s130 = smul.u32 2, %s13
      %p131 = scmp.lt.s32.totalorder %s130, 5
      %s132 = scalar_select %p131, %s130, 5
      %s133 = smul.addr %s132, 8
      %s134 = scalar_lea.vmem %s0, %s133
      %p135 = pneg %p34
      %p136 = pneg %p31
      %s137 = smul.u32 2, %s13
      %p138 = scmp.lt.s32.totalorder %s137, 5
      %s139 = scalar_select %p138, %s137, 5
      %s140 = smul.addr %s139, 8
      %s141 = scalar_lea.vmem %s1, %s140
      %p142 = pneg %p60
      %p143 = pneg %p57
      %p144 = pneg %p86
      %p145 = pneg %p83
      %s146 = smul.u32 2, %s13
      %p147 = scmp.lt.s32.totalorder %s146, 5
      %s148 = scalar_select %p147, %s146, 5
      %s149 = smul.addr %s148, 8
      %s150 = scalar_lea.vmem %s2, %s149
      %s151 = smul.u32 2, %s13
      %p152 = scmp.lt.s32.totalorder %s151, 5
      %s153 = scalar_select %p152, %s151, 5
      %s154 = smul.addr %s153, 8
      %s155 = scalar_lea.vmem %s0, %s154
      %s156 = smul.u32 2, %s13
      %s157 = smul.u32 2, %s13
      %p158 = scmp.lt.s32.totalorder %s157, 5
      %s159 = scalar_select %p158, %s157, 5
      %s160 = smul.addr %s159, 8
      %s161 = scalar_lea.vmem %s1, %s160
      %s162 = smul.u32 2, %s13
      %s163 = smul.u32 2, %s13
      %p164 = scmp.lt.s32.totalorder %s163, 5
      %s165 = scalar_select %p164, %s163, 5
      %s166 = smul.addr %s165, 8
      %s167 = scalar_lea.vmem %s2, %s166
      %s168 = smul.u32 2, %s13
      %v169 = vld [vmem:[%s155] sm:$0xff]
      %v170 = vld [vmem:[%s155 + $0x8] sm:$0xff]
      %v171 = vld [vmem:[%s161] sm:$0xff]
      %v172 = vld [vmem:[%s161 + $0x8] sm:$0xff]
      %vm173 = vcmask 326656
      %v174 = vsel %vm173, %v169, -inf
      %175 = vmax.xlane.f32.xlu0 %v174
      %v176 = vpop.xlane.xlu0 %175
      %v177 = vsel %vm173, %v170, -inf
      %178 = vmax.xlane.f32.xlu0 %v177
      %v179 = vpop.xlane.xlu0 %178
      %v180 = vsub.f32 %v169, %v176
      %v181 = vsub.f32 %v170, %v179
      %v182 = vmul.f32 %v180, 1.442695
      %v183 = vpow.pop %v182
      %v184 = vmul.f32 %v181, 1.442695
      %v185 = vpow.pop %v184
      %v186 = vsel %vm173, %v183, 0.0
      %187 = vadd.xlane.f32.xlu0 %v186
      %v188 = vpop.xlane.xlu0 %187
      %v189 = vsel %vm173, %v185, 0.0
      %190 = vadd.xlane.f32.xlu0 %v189
      %v191 = vpop.xlane.xlu0 %190
      %v192 = vlog2.pop %v188
      %v193 = vmul.f32 %v192, 0.6931472
      %v194 = vlog2.pop %v191
      %v195 = vmul.f32 %v194, 0.6931472
      %v196 = vsel %vm173, %v180, 0.0
      %197 = vadd.xlane.f32.xlu0 %v196
      %v198 = vpop.xlane.xlu0 %197
      %v199 = vsel %vm173, %v181, 0.0
      %200 = vadd.xlane.f32.xlu0 %v199
      %v201 = vpop.xlane.xlu0 %200
      %v202 = vmul.f32 %v193, 40.0
      %v203 = vmul.f32 %v195, 40.0
      %v204 = vsub.f32 %v198, %v202
      %v205 = vsub.f32 %v201, %v203
      %v206 = vlaneseq
      %v207 = vand.u32 %v206, 127
      %208 = vset.pattern.permute.xlu0 0
      %209 = vperm.xlu0 %208, %v171
      %v210 = vpop.permute.xlu0 %209
      %211 = vset.pattern.permute.xlu0 0
      %212 = vperm.xlu0 %211, %v172
      %v213 = vpop.permute.xlu0 %212
      %vm214 = vcmp.eq.s32.totalorder %v207, %v210
      %vm215 = vcmp.eq.s32.totalorder %v207, %v213
      %v216 = vsel %vm214, %v180, 0.0
      %v217 = vsel %vm215, %v181, 0.0
      %v218 = vsel %vm173, %v216, 0.0
      %219 = vadd.xlane.f32.xlu0 %v218
      %v220 = vpop.xlane.xlu0 %219
      %v221 = vsel %vm173, %v217, 0.0
      %222 = vadd.xlane.f32.xlu0 %v221
      %v223 = vpop.xlane.xlu0 %222
      %v224 = vsub.f32 %v220, %v193
      %v225 = vsub.f32 %v223, %v195
      %v226 = vmul.f32 %v204, 0.0025641026
      %v227 = vmul.f32 %v205, 0.0025641026
      %v228 = vmul.f32 %v224, 0.8974359
      %v229 = vmul.f32 %v225, 0.8974359
      %v230 = vadd.f32 %v226, %v228
      %v231 = vadd.f32 %v227, %v229
      %v232 = vsub.f32 0.0, %v230
      %v233 = vsub.f32 0.0, %v231
      %vm234 = vcmask 7168
      %235 = vst.msk [vmem:[%s167] sm:$0xff] %vm234, %v232
      %236 = vst.msk [vmem:[%s167 + $0x8] sm:$0xff] %vm234, %v233
      %s237 = smul.u32 2, %s13
      %p238 = scmp.lt.s32.totalorder %s237, 5
      %s239 = scalar_select %p238, %s237, 5
      %s240 = smul.addr %s239, 8
      %s241 = scalar_lea.vmem %s2, %s240
      // Predicated region
      $region29: #{tpu_custom_call.1} parent=27 // pred_check
        %p242 = pneg %p83
      $region30: #{tpu_custom_call.1} parent=27 // pred_check_branch
        %244 = sbr.rel (%p242) target = $region32
      $region31: #{tpu_custom_call.1} parent=27 // pred_region
        %s245 = smul.u32 2, %s13
      $region32: #{tpu_custom_call.1} parent=27 // pred_fallthru
        _
    $region28: #{tpu_custom_call.1} parent=5 // pred_fallthru
      _
    %p246 = scmp.le.s32.totalorder 2, %s8
    // Predicated region
    $region33: #{tpu_custom_call.1} parent=5 // pred_check
      %p247 = pneg %p246
    $region34: #{tpu_custom_call.1} parent=5 // pred_check_branch
      %249 = sbr.rel (%p247) target = $region36
    $region35: #{tpu_custom_call.1} parent=5 // pred_region
      %s250 = ssub.s32 %s8, 2
      // Predicated region
      $region37: #{tpu_custom_call.1} parent=35 // pred_check
        %p251 = pneg %p89
      $region38: #{tpu_custom_call.1} parent=35 // pred_check_branch
        %253 = sbr.rel (%p251) target = $region40
      $region39: #{tpu_custom_call.1} parent=35 // pred_region
        %s254 = smul.u32 2, %s14
        %p255 = scmp.lt.s32.totalorder %s254, 5
        %s256 = scalar_select %p255, %s254, 5
        %s257 = smul.addr %s256, 8
        %s258 = scalar_lea.vmem %s2, %s257
      $region40: #{tpu_custom_call.1} parent=35 // pred_fallthru
        _
    $region36: #{tpu_custom_call.1} parent=5 // pred_fallthru
      _
  $region6: #{tpu_custom_call.1} parent=0 // loop_footer
    %s12 = sadd.s32 1, %s8
  $region7: #{tpu_custom_call.1} parent=0 // loop_footer_branch
    %7 = sbr.rel target = $region3
  $region8: #{tpu_custom_call.1} parent=0 // loop_exit
    _

</llo_original>
